<compile_context>
chip_gen: v6e
topology: v6e:2x2x1
jax: 0.10.0
libtpu: 0.0.40
codegen_flags: <defaults>
</compile_context>

<pallas_src>
import jax
import jax.numpy as jnp
from jax.experimental import pallas as pl
from jax.experimental.pallas import tpu as pltpu


def _conv3x3_swish_kernel(x_ref, w_ref, b_ref, o_ref, col_ref):
    # x_ref  : (1, 1, CinP, Mp_in)  bf16  padded NCHW row-tile, spatial dims folded
    #                                     onto the lane axis (+2 slack columns)
    # w_ref  : (Cout, 9*CinP)       bf16  tap-major im2col weights
    # b_ref  : (Cout, 1)            f32   bias
    # o_ref  : (1, 1, Cout, Mp)     bf16  conv+bias+swish (2 junk cols per row)
    # col_ref: (9*CinP, Mp)         bf16  VMEM im2col scratch slab
    cinp = x_ref.shape[2]
    mp = o_ref.shape[3]                       # TH * (W + 2)
    mp_in = x_ref.shape[3]                    # (TH + 2) * (W + 2) + 2
    wp2 = (mp_in - mp - 2) // 2               # W + 2

    # Build the bf16 im2col slab: one lane-shifted slice per 3x3 tap, written at
    # 16-row-aligned sublane offsets (CinP is a multiple of 16).  Slices stay in
    # bounds because off_max + mp = 2*wp2 + 2 + mp == mp_in.  No dtype round trip:
    # the slab stays bf16 all the way into the MXU.
    for k in range(9):
        dy, dx = divmod(k, 3)
        off = dy * wp2 + dx                   # static Python int
        col_ref[k * cinp:(k + 1) * cinp, :] = x_ref[0, 0, :, off:off + mp]

    # Single MXU matmul over K = 9*CinP: bf16 operands, f32 accumulation.
    acc = jnp.dot(w_ref[...], col_ref[...], preferred_element_type=jnp.float32)
    acc = acc + b_ref[...]                                   # bias in f32
    sig = pl.reciprocal(1.0 + jnp.exp(-acc), approx=True)    # sigmoid: EUP exp + approx recip
    o_ref[0, 0, :, :] = (acc * sig).astype(o_ref.dtype)


def _vmem_policy():
    """(per-tile budget, vmem_limit_bytes) derived from the part's VMEM capacity.
    v5e/v6e (128 MiB) -> 32 / 96 MiB; v7x (64 MiB per TC) -> 16 / 48 MiB."""
    try:
        cap = int(pltpu.get_tpu_info().vmem_capacity_bytes)
    except Exception:
        cap = 64 * 1024 * 1024          # conservative (v7x-safe) fallback
    return cap // 4, (3 * cap) // 4


def _tile_footprint_bytes(th, W, cinp, cout):
    wp2 = W + 2
    mp = th * wp2
    mp_in = (th + 2) * wp2 + 2
    in_b = 2 * (2 * cinp * mp_in)              # bf16 input tile, double-buffered
    out_b = 2 * (2 * cout * mp)                # bf16 output tile, double-buffered
    w_b = 2 * (2 * cout * 9 * cinp)            # bf16 weights (pessimistically x2)
    col_b = 2 * 9 * cinp * mp                  # bf16 im2col scratch (single copy)
    tmp_b = 2 * cinp * mp_in + 12 * cout * mp  # loaded x value + f32 acc/sig temps
    return in_b + out_b + w_b + col_b + tmp_b


def _pick_row_tile(H, W, N, cinp, cout, budget, limit):
    """Largest divisor of H whose pipelined tile footprint fits `budget`, but keep
    at least two parallel grid items (N * nT >= 2) so dual-TC parts have work."""
    divisors = [d for d in range(1, H + 1) if H % d == 0]
    fitting = [d for d in divisors if _tile_footprint_bytes(d, W, cinp, cout) <= budget]
    if not fitting:
        if _tile_footprint_bytes(1, W, cinp, cout) > limit:
            raise ValueError(
                "upsample_block: a single-row tile already exceeds the VMEM limit; "
                "W * channels too large for this tiling scheme")
        fitting = [1]
    th = max(fitting)
    if N * (H // th) < 2:
        multi = [d for d in fitting if H // d >= 2]
        if multi:
            th = max(multi)
    return th


def upsample_block(x_nchw, weight_oihw, bias, *, r=2):
    """swish(PixelShuffle(r)(Conv2d(3x3, stride=1, pad=1)(x))) via a Pallas TPU kernel."""
    N, Cin, H, W = x_nchw.shape
    Cout = weight_oihw.shape[0]
    assert Cout % (r * r) == 0, "conv out_channels must be divisible by r^2 for PixelShuffle"

    CinP = ((Cin + 15) // 16) * 16            # bf16 sublane tile is (16, 128)
    budget, vmem_limit = _vmem_policy()
    TH = _pick_row_tile(H, W, N, CinP, Cout, budget, vmem_limit)
    nT = H // TH
    Wp2 = W + 2
    mp = TH * Wp2                             # output tile lane width (2 junk cols / row)
    mp_in = (TH + 2) * Wp2 + 2                # +2 slack so dy=2,dx<=2 taps stay in bounds

    # Zero-pad directly in NCHW (channels -> CinP, H/W by 1), cast the MXU operand to
    # bf16, and fold the padded spatial dims onto the lane axis (lane-dense DMAs; no
    # NCHW->NHWC transpose pass in the wrapper).
    x_pad = jnp.pad(x_nchw.astype(jnp.bfloat16),
                    ((0, 0), (0, CinP - Cin), (1, 1), (1, 1)))       # (N, CinP, H+2, Wp2)
    if nT == 1:
        tiles = x_pad[:, None]                                       # no halo duplication
    else:
        # TODO(synk): for nT > 1 this materializes the 2-row conv halo in HBM; a manual
        # make_async_copy pipeline from a pl.ANY input would avoid that extra copy.
        tiles = jnp.stack(
            [x_pad[:, :, t * TH:t * TH + TH + 2, :] for t in range(nT)], axis=1)
    x_tiles = tiles.reshape(N, nT, CinP, (TH + 2) * Wp2)
    x_tiles = jnp.pad(x_tiles, ((0, 0), (0, 0), (0, 0), (0, mp_in - (TH + 2) * Wp2)))

    # Tap-major im2col weights: w_mat[co, (dy*3+dx)*CinP + ci] = weight[co, ci, dy, dx].
    w_p = jnp.pad(weight_oihw, ((0, 0), (0, CinP - Cin), (0, 0), (0, 0)))
    w_mat = jnp.transpose(w_p, (0, 2, 3, 1)).reshape(Cout, 9 * CinP).astype(jnp.bfloat16)
    b_col = bias.reshape(Cout, 1).astype(jnp.float32)

    cost = pl.CostEstimate(
        flops=int(2 * N * Cout * H * Wp2 * 9 * CinP),
        transcendentals=int(N * Cout * H * Wp2),
        bytes_accessed=int(x_tiles.size * 2 + w_mat.size * 2 + Cout * 4
                           + N * nT * Cout * mp * 2),
    )

    ext = pl.pallas_call(
        _conv3x3_swish_kernel,
        out_shape=jax.ShapeDtypeStruct((N, nT, Cout, mp), jnp.bfloat16),
        grid_spec=pltpu.PrefetchScalarGridSpec(
            num_scalar_prefetch=0,
            grid=(N, nT),
            in_specs=[
                pl.BlockSpec((1, 1, CinP, mp_in), lambda n, t: (n, t, 0, 0)),
                pl.BlockSpec((Cout, 9 * CinP), lambda n, t: (0, 0)),
                pl.BlockSpec((Cout, 1), lambda n, t: (0, 0)),
            ],
            out_specs=pl.BlockSpec((1, 1, Cout, mp), lambda n, t: (n, t, 0, 0)),
            scratch_shapes=[pltpu.VMEM((9 * CinP, mp), jnp.bfloat16)],
        ),
        compiler_params=pltpu.CompilerParams(
            dimension_semantics=("parallel", "parallel"),
            vmem_limit_bytes=int(vmem_limit),
        ),
        cost_estimate=cost,
    )(x_tiles, w_mat, b_col)

    # Single fused XLA permutation pass over the (bf16) conv-sized tensor:
    # reassemble row tiles, drop the 2 junk columns per row, and apply
    # PixelShuffle(r).  Swish already ran in-kernel (elementwise, so it commutes
    # with this pure permutation).  Cast to the caller dtype only at the end so
    # the big transpose moves bf16, not f32.
    C = Cout // (r * r)
    y = ext.reshape(N, nT, C, r, r, TH, Wp2)[..., :W]
    y = jnp.transpose(y, (0, 2, 1, 5, 3, 6, 4))          # (N, C, nT, TH, r, W, r)
    y = y.reshape(N, C, H * r, W * r)
    return y.astype(x_nchw.dtype)


def _reference(x_nchw, weight_oihw, bias, r=2):
    """Pure-JAX f32 reference: Conv2d(3x3, pad=1) -> PixelShuffle(r) -> swish."""
    conv = jax.lax.conv_general_dilated(
        x_nchw.astype(jnp.float32), weight_oihw.astype(jnp.float32),
        window_strides=(1, 1), padding=((1, 1), (1, 1)),
        dimension_numbers=("NCHW", "OIHW", "NCHW"))
    conv = conv + bias.astype(jnp.float32)[None, :, None, None]
    N, Cout, H, W = conv.shape
    C = Cout // (r * r)
    y = conv.reshape(N, C, r, r, H, W)
    y = jnp.transpose(y, (0, 1, 4, 2, 5, 3)).reshape(N, C, H * r, W * r)
    return y * jax.nn.sigmoid(y)


if __name__ == "__main__":
    key = jax.random.PRNGKey(0)
    k_x, k_w, k_b = jax.random.split(key, 3)

    N, Cin, H, W = 2, 4, 16, 16
    Cout = 16   # divisible by r*r = 4 -> PixelShuffle(2) output has 4 channels

    x = jax.random.normal(k_x, (N, Cin, H, W), dtype=jnp.float32)
    fan_in = Cin * 3 * 3
    weight = jax.random.normal(k_w, (Cout, Cin, 3, 3), dtype=jnp.float32) / jnp.sqrt(fan_in)
    bias = jax.random.normal(k_b, (Cout,), dtype=jnp.float32) * 0.01

    out = jax.jit(upsample_block)(x, weight, bias)
    out = jax.block_until_ready(out)

    ref = _reference(x, weight, bias)
    assert out.shape == (N, Cout // 4, H * 2, W * 2)
    # bf16 MXU operands + bf16 kernel output + approx-reciprocal sigmoid => slightly
    # looser tolerance than a pure-f32 path.
    assert jnp.allclose(out, ref.astype(out.dtype), atol=2e-2, rtol=2e-2), \
        float(jnp.max(jnp.abs(out - ref)))

    print("KERNEL_OK")
</pallas_src>

<mosaic_0001>
module attributes {stable_mosaic.version = 11 : i64} {
  func.func @_conv3x3_swish_kernel(%arg0: i32, %arg1: i32, %arg2: memref<1x1x16x326xbf16, #tpu.memory_space<vmem>>, %arg3: memref<16x144xbf16, #tpu.memory_space<vmem>>, %arg4: memref<16x1xf32, #tpu.memory_space<vmem>>, %arg5: memref<1x1x16x288xbf16, #tpu.memory_space<vmem>>, %arg6: memref<144x288xbf16, #tpu.memory_space<vmem>>) attributes {dimension_semantics = [#tpu.dimension_semantics<parallel>, #tpu.dimension_semantics<parallel>], iteration_bounds = array<i64: 2, 1>, scalar_prefetch = 0 : i64, scratch_operands = 1 : i64, tpu.core_type = #tpu.core_type<tc>, window_params = [{transform_indices = @transform_0, window_bounds = array<i64: 1, 1, 16, 326>}, {pipeline_mode = #tpu.pipeline_mode<synchronous>, transform_indices = @transform_1, window_bounds = array<i64: 16, 144>}, {pipeline_mode = #tpu.pipeline_mode<synchronous>, transform_indices = @transform_2, window_bounds = array<i64: 16, 1>}, {transform_indices = @transform_3, window_bounds = array<i64: 1, 1, 16, 288>}]} {
    %c0 = arith.constant 0 : index
    %c0_0 = arith.constant 0 : index
    %c0_1 = arith.constant 0 : index
    %c0_2 = arith.constant 0 : index
    %0 = vector.load %arg2[%c0, %c0_0, %c0_1, %c0_2] : memref<1x1x16x326xbf16, #tpu.memory_space<vmem>>, vector<1x1x16x288xbf16>
    %1 = vector.shape_cast %0 : vector<1x1x16x288xbf16> to vector<16x288xbf16>
    %c0_3 = arith.constant 0 : index
    %c0_4 = arith.constant 0 : index
    %2 = vector.load %arg6[%c0_3, %c0_4] : memref<144x288xbf16, #tpu.memory_space<vmem>>, vector<16x288xbf16>
    tpu.vector_store %arg6[%c0_3, %c0_4], %1 {strides = array<i32>} : memref<144x288xbf16, #tpu.memory_space<vmem>>, vector<16x288xbf16>,
    %c0_5 = arith.constant 0 : index
    %c0_6 = arith.constant 0 : index
    %c0_7 = arith.constant 0 : index
    %c1 = arith.constant 1 : index
    %3 = vector.load %arg2[%c0_5, %c0_6, %c0_7, %c1] : memref<1x1x16x326xbf16, #tpu.memory_space<vmem>>, vector<1x1x16x288xbf16>
    %4 = vector.shape_cast %3 : vector<1x1x16x288xbf16> to vector<16x288xbf16>
    %c16 = arith.constant 16 : index
    %c0_8 = arith.constant 0 : index
    %5 = vector.load %arg6[%c16, %c0_8] : memref<144x288xbf16, #tpu.memory_space<vmem>>, vector<16x288xbf16>
    tpu.vector_store %arg6[%c16, %c0_8], %4 {strides = array<i32>} : memref<144x288xbf16, #tpu.memory_space<vmem>>, vector<16x288xbf16>,
    %c0_9 = arith.constant 0 : index
    %c0_10 = arith.constant 0 : index
    %c0_11 = arith.constant 0 : index
    %c2 = arith.constant 2 : index
    %6 = vector.load %arg2[%c0_9, %c0_10, %c0_11, %c2] : memref<1x1x16x326xbf16, #tpu.memory_space<vmem>>, vector<1x1x16x288xbf16>
    %7 = vector.shape_cast %6 : vector<1x1x16x288xbf16> to vector<16x288xbf16>
    %c32 = arith.constant 32 : index
    %c0_12 = arith.constant 0 : index
    %8 = vector.load %arg6[%c32, %c0_12] : memref<144x288xbf16, #tpu.memory_space<vmem>>, vector<16x288xbf16>
    tpu.vector_store %arg6[%c32, %c0_12], %7 {strides = array<i32>} : memref<144x288xbf16, #tpu.memory_space<vmem>>, vector<16x288xbf16>,
    %c0_13 = arith.constant 0 : index
    %c0_14 = arith.constant 0 : index
    %c0_15 = arith.constant 0 : index
    %c18 = arith.constant 18 : index
    %9 = vector.load %arg2[%c0_13, %c0_14, %c0_15, %c18] : memref<1x1x16x326xbf16, #tpu.memory_space<vmem>>, vector<1x1x16x288xbf16>
    %10 = vector.shape_cast %9 : vector<1x1x16x288xbf16> to vector<16x288xbf16>
    %c48 = arith.constant 48 : index
    %c0_16 = arith.constant 0 : index
    %11 = vector.load %arg6[%c48, %c0_16] : memref<144x288xbf16, #tpu.memory_space<vmem>>, vector<16x288xbf16>
    tpu.vector_store %arg6[%c48, %c0_16], %10 {strides = array<i32>} : memref<144x288xbf16, #tpu.memory_space<vmem>>, vector<16x288xbf16>,
    %c0_17 = arith.constant 0 : index
    %c0_18 = arith.constant 0 : index
    %c0_19 = arith.constant 0 : index
    %c19 = arith.constant 19 : index
    %12 = vector.load %arg2[%c0_17, %c0_18, %c0_19, %c19] : memref<1x1x16x326xbf16, #tpu.memory_space<vmem>>, vector<1x1x16x288xbf16>
    %13 = vector.shape_cast %12 : vector<1x1x16x288xbf16> to vector<16x288xbf16>
    %c64 = arith.constant 64 : index
    %c0_20 = arith.constant 0 : index
    %14 = vector.load %arg6[%c64, %c0_20] : memref<144x288xbf16, #tpu.memory_space<vmem>>, vector<16x288xbf16>
    tpu.vector_store %arg6[%c64, %c0_20], %13 {strides = array<i32>} : memref<144x288xbf16, #tpu.memory_space<vmem>>, vector<16x288xbf16>,
    %c0_21 = arith.constant 0 : index
    %c0_22 = arith.constant 0 : index
    %c0_23 = arith.constant 0 : index
    %c20 = arith.constant 20 : index
    %15 = vector.load %arg2[%c0_21, %c0_22, %c0_23, %c20] : memref<1x1x16x326xbf16, #tpu.memory_space<vmem>>, vector<1x1x16x288xbf16>
    %16 = vector.shape_cast %15 : vector<1x1x16x288xbf16> to vector<16x288xbf16>
    %c80 = arith.constant 80 : index
    %c0_24 = arith.constant 0 : index
    %17 = vector.load %arg6[%c80, %c0_24] : memref<144x288xbf16, #tpu.memory_space<vmem>>, vector<16x288xbf16>
    tpu.vector_store %arg6[%c80, %c0_24], %16 {strides = array<i32>} : memref<144x288xbf16, #tpu.memory_space<vmem>>, vector<16x288xbf16>,
    %c0_25 = arith.constant 0 : index
    %c0_26 = arith.constant 0 : index
    %c0_27 = arith.constant 0 : index
    %c36 = arith.constant 36 : index
    %18 = vector.load %arg2[%c0_25, %c0_26, %c0_27, %c36] : memref<1x1x16x326xbf16, #tpu.memory_space<vmem>>, vector<1x1x16x288xbf16>
    %19 = vector.shape_cast %18 : vector<1x1x16x288xbf16> to vector<16x288xbf16>
    %c96 = arith.constant 96 : index
    %c0_28 = arith.constant 0 : index
    %20 = vector.load %arg6[%c96, %c0_28] : memref<144x288xbf16, #tpu.memory_space<vmem>>, vector<16x288xbf16>
    tpu.vector_store %arg6[%c96, %c0_28], %19 {strides = array<i32>} : memref<144x288xbf16, #tpu.memory_space<vmem>>, vector<16x288xbf16>,
    %c0_29 = arith.constant 0 : index
    %c0_30 = arith.constant 0 : index
    %c0_31 = arith.constant 0 : index
    %c37 = arith.constant 37 : index
    %21 = vector.load %arg2[%c0_29, %c0_30, %c0_31, %c37] : memref<1x1x16x326xbf16, #tpu.memory_space<vmem>>, vector<1x1x16x288xbf16>
    %22 = vector.shape_cast %21 : vector<1x1x16x288xbf16> to vector<16x288xbf16>
    %c112 = arith.constant 112 : index
    %c0_32 = arith.constant 0 : index
    %23 = vector.load %arg6[%c112, %c0_32] : memref<144x288xbf16, #tpu.memory_space<vmem>>, vector<16x288xbf16>
    tpu.vector_store %arg6[%c112, %c0_32], %22 {strides = array<i32>} : memref<144x288xbf16, #tpu.memory_space<vmem>>, vector<16x288xbf16>,
    %c0_33 = arith.constant 0 : index
    %c0_34 = arith.constant 0 : index
    %c0_35 = arith.constant 0 : index
    %c38 = arith.constant 38 : index
    %24 = vector.load %arg2[%c0_33, %c0_34, %c0_35, %c38] : memref<1x1x16x326xbf16, #tpu.memory_space<vmem>>, vector<1x1x16x288xbf16>
    %25 = vector.shape_cast %24 : vector<1x1x16x288xbf16> to vector<16x288xbf16>
    %c128 = arith.constant 128 : index
    %c0_36 = arith.constant 0 : index
    %26 = vector.load %arg6[%c128, %c0_36] : memref<144x288xbf16, #tpu.memory_space<vmem>>, vector<16x288xbf16>
    tpu.vector_store %arg6[%c128, %c0_36], %25 {strides = array<i32>} : memref<144x288xbf16, #tpu.memory_space<vmem>>, vector<16x288xbf16>,
    %c0_37 = arith.constant 0 : index
    %c0_38 = arith.constant 0 : index
    %27 = vector.load %arg3[%c0_37, %c0_38] : memref<16x144xbf16, #tpu.memory_space<vmem>>, vector<16x144xbf16>
    %c0_39 = arith.constant 0 : index
    %c0_40 = arith.constant 0 : index
    %28 = vector.load %arg6[%c0_39, %c0_40] : memref<144x288xbf16, #tpu.memory_space<vmem>>, vector<144x288xbf16>
    %cst = arith.constant dense<0.000000e+00> : vector<16x288xf32>
    %29 = tpu.matmul %27, %28, %cst {dimension_numbers = #tpu.dot_dimension_numbers<[1], [0], [0], [1], [0, 0, 1, 1], [], []>} : vector<16x144xbf16>, vector<144x288xbf16>, vector<16x288xf32> -> vector<16x288xf32>
    %c0_41 = arith.constant 0 : index
    %c0_42 = arith.constant 0 : index
    %30 = vector.load %arg4[%c0_41, %c0_42] : memref<16x1xf32, #tpu.memory_space<vmem>>, vector<16x1xf32>
    %31 = vector.broadcast %30 : vector<16x1xf32> to vector<16x288xf32>
    %32 = arith.addf %29, %31 : vector<16x288xf32>
    %cst_43 = arith.constant 0.000000e+00 : f32
    %33 = vector.broadcast %cst_43 : f32 to vector<16x288xf32>
    %34 = arith.subf %33, %32 : vector<16x288xf32>
    %35 = math.exp %34 : vector<16x288xf32>
    %cst_44 = arith.constant 1.000000e+00 : f32
    %36 = vector.broadcast %cst_44 : f32 to vector<16x288xf32>
    %37 = arith.addf %36, %35 : vector<16x288xf32>
    %38 = tpu.reciprocal %37 {approx = true} : vector<16x288xf32> -> vector<16x288xf32>
    %39 = arith.mulf %32, %38 : vector<16x288xf32>
    %40 = arith.truncf %39 : vector<16x288xf32> to vector<16x288xbf16>
    %c0_45 = arith.constant 0 : index
    %c0_46 = arith.constant 0 : index
    %c0_47 = arith.constant 0 : index
    %c0_48 = arith.constant 0 : index
    %41 = vector.load %arg5[%c0_45, %c0_46, %c0_47, %c0_48] : memref<1x1x16x288xbf16, #tpu.memory_space<vmem>>, vector<1x1x16x288xbf16>
    %42 = vector.shape_cast %41 : vector<1x1x16x288xbf16> to vector<16x288xbf16>
    %43 = vector.shape_cast %40 : vector<16x288xbf16> to vector<1x1x16x288xbf16>
    tpu.vector_store %arg5[%c0_45, %c0_46, %c0_47, %c0_48], %43 {strides = array<i32>} : memref<1x1x16x288xbf16, #tpu.memory_space<vmem>>, vector<1x1x16x288xbf16>,
    return
  }
  func.func @transform_0(%arg0: i32, %arg1: i32) -> (i32, i32, i32, i32) {
    %c0_i32 = arith.constant 0 : i32
    %c0_i32_0 = arith.constant 0 : i32
    %c0_i32_1 = arith.constant 0 : i32
    return %arg0, %arg1, %c0_i32, %c0_i32_0 : i32, i32, i32, i32
  }
  func.func @transform_1(%arg0: i32, %arg1: i32) -> (i32, i32) {
    %c0_i32 = arith.constant 0 : i32
    %c0_i32_0 = arith.constant 0 : i32
    %c0_i32_1 = arith.constant 0 : i32
    return %c0_i32, %c0_i32_0 : i32, i32
  }
  func.func @transform_2(%arg0: i32, %arg1: i32) -> (i32, i32) {
    %c0_i32 = arith.constant 0 : i32
    %c0_i32_0 = arith.constant 0 : i32
    %c0_i32_1 = arith.constant 0 : i32
    return %c0_i32, %c0_i32_0 : i32, i32
  }
  func.func @transform_3(%arg0: i32, %arg1: i32) -> (i32, i32, i32, i32) {
    %c0_i32 = arith.constant 0 : i32
    %c0_i32_0 = arith.constant 0 : i32
    %c0_i32_1 = arith.constant 0 : i32
    return %arg0, %arg1, %c0_i32, %c0_i32_0 : i32, i32, i32, i32
  }
}

</mosaic_0001>

<llo_original>
// kernel: upsample_block.1
$region0: #{upsample_block.1}
  #allocation0 [shape = 'u32[]', space=smem, size = 0x4, offset = 0x4, fixed_abs, tag = 'smem constant byte address 0x4 - core index']
  #allocation1 [shape = 'u32[144,128]{1,0:T(1,128)}', space=vmem, size = 0x12000, scoped, tag = 'internal scratch']
  #allocation2 [shape = 'bf16[144,288]{1,0:T(8,128)(2,1)}', space=vmem, size = 0x1b000, scoped, tag = 'scratch operand']
  %s0 = inlined_call_operand.vmem [shape: bf16[2,1,16,326], index: 0, kind: input, shape index: {}]
  %s1 = inlined_call_operand.vmem [shape: bf16[16,144], index: 1, kind: input, shape index: {}]
  %s2 = inlined_call_operand.vmem [shape: f32[16,1], index: 2, kind: input, shape index: {}]
  %s3 = inlined_call_operand.vmem [shape: bf16[2,1,16,288], index: 3, kind: output, shape index: {}]
  %s4 = sld [smem:[#allocation0]]
  $region45: #{upsample_block.1} parent=0
    _
  %s6 = ssub.s32 1, %s4
  %s7 = scalar_select 0, %s6, %s4
  loop: start=0, step=1, limit=4
  $region2: #{upsample_block.1} parent=0 // loop_pre_header
    _
  $region3: #{upsample_block.1} parent=0 // loop_header
    %s9 = sphi 0, %s13
    %p10 = scmp.ge.s32.totalorder %s9, 4
    %s16 = sphi 0, %s28
    %s17 = sphi 0, %s24
    %s18 = sphi 0, %s16
    %s19 = sphi 0, %s17
    %s20 = sphi 0, %s18
    %s21 = sphi 0, %s19
    %s33 = sphi 0, %s35
    %s36 = sphi 0, %s33
    %s37 = sphi 0, %s36
    %s53 = sphi 0, %s37
    %s57 = sphi 0, %s57
    %s59 = sphi 0, %s57
    %s60 = sphi 0, %s59
    %s74 = sphi 0, %s60
    %s78 = sphi 0, %s78
    %s80 = sphi 0, %s78
    %s81 = sphi 0, %s80
    %s95 = sphi 0, %s81
    %s103 = sphi 0, %s105
    %s106 = sphi 0, %s103
    %s107 = sphi 0, %s106
    %s123 = sphi 0, %s107
  $region4: #{upsample_block.1} parent=0 // loop_header_branch
    %12 = sbr.rel (%p10) target = $region8
  $region5: #{upsample_block.1} parent=0 // loop_body
    %s14 = ssub.s32 %s9, 1
    %s15 = ssub.s32 %s9, 2
    %s22 = sadd.s32 1, %s17
    %p23 = scmp.ge.s32.totalorder %s22, 1
    %s24 = scalar_select %p23, 0, %s22
    %s25 = sadd.s32 1, %s16
    %s26 = scalar_select %p23, %s25, %s16
    %p27 = scmp.ge.s32.totalorder %s26, 2
    %s28 = scalar_select %p27, 0, %s26
    %s29 = ssub.s32 %s16, %s28
    %s30 = ssub.s32 %s17, %s24
    %s31 = sor.u32 %s29, %s30
    %p32 = scmp.eq.s32.totalorder %s31, 0
    %s34 = sadd.s32 %s33, 1
    %s35 = scalar_select %p32, %s33, %s34
    %p38 = pneg %p32
    %p39 = scmp.eq.s32.totalorder %s9, 1
    %p40 = por %p38, %p39
    %p41 = scmp.ne.s32.totalorder %s33, %s36
    %p42 = scmp.eq.s32.totalorder %s9, 0
    %p43 = por %p41, %p42
    %p44 = scmp.ne.s32.totalorder %s33, %s36
    %p45 = scmp.eq.s32.totalorder %s14, 1
    %p46 = por %p44, %p45
    %p47 = scmp.ne.s32.totalorder %s36, %s37
    %p48 = scmp.eq.s32.totalorder %s14, 0
    %p49 = por %p47, %p48
    %p50 = scmp.ne.s32.totalorder %s36, %s37
    %p51 = scmp.eq.s32.totalorder %s15, 1
    %p52 = por %p50, %p51
    %p54 = scmp.ne.s32.totalorder %s37, %s53
    %p55 = scmp.eq.s32.totalorder %s15, 0
    %p56 = por %p54, %p55
    %s58 = sadd.s32 %s57, 1
    %p61 = scmp.eq.s32.totalorder %s9, 1
    %p62 = scmp.ne.s32.totalorder %s57, %s59
    %p63 = scmp.eq.s32.totalorder %s9, 0
    %p64 = por %p62, %p63
    %p65 = scmp.ne.s32.totalorder %s57, %s59
    %p66 = scmp.eq.s32.totalorder %s14, 1
    %p67 = por %p65, %p66
    %p68 = scmp.ne.s32.totalorder %s59, %s60
    %p69 = scmp.eq.s32.totalorder %s14, 0
    %p70 = por %p68, %p69
    %p71 = scmp.ne.s32.totalorder %s59, %s60
    %p72 = scmp.eq.s32.totalorder %s15, 1
    %p73 = por %p71, %p72
    %p75 = scmp.ne.s32.totalorder %s60, %s74
    %p76 = scmp.eq.s32.totalorder %s15, 0
    %p77 = por %p75, %p76
    %s79 = sadd.s32 %s78, 1
    %p82 = scmp.eq.s32.totalorder %s9, 1
    %p83 = scmp.ne.s32.totalorder %s78, %s80
    %p84 = scmp.eq.s32.totalorder %s9, 0
    %p85 = por %p83, %p84
    %p86 = scmp.ne.s32.totalorder %s78, %s80
    %p87 = scmp.eq.s32.totalorder %s14, 1
    %p88 = por %p86, %p87
    %p89 = scmp.ne.s32.totalorder %s80, %s81
    %p90 = scmp.eq.s32.totalorder %s14, 0
    %p91 = por %p89, %p90
    %p92 = scmp.ne.s32.totalorder %s80, %s81
    %p93 = scmp.eq.s32.totalorder %s15, 1
    %p94 = por %p92, %p93
    %p96 = scmp.ne.s32.totalorder %s81, %s95
    %p97 = scmp.eq.s32.totalorder %s15, 0
    %p98 = por %p96, %p97
    %s99 = ssub.s32 %s16, %s28
    %s100 = ssub.s32 %s17, %s24
    %s101 = sor.u32 %s99, %s100
    %p102 = scmp.eq.s32.totalorder %s101, 0
    %s104 = sadd.s32 %s103, 1
    %s105 = scalar_select %p102, %s103, %s104
    %p108 = pneg %p102
    %p109 = scmp.eq.s32.totalorder %s9, 1
    %p110 = por %p108, %p109
    %p111 = scmp.ne.s32.totalorder %s103, %s106
    %p112 = scmp.eq.s32.totalorder %s9, 0
    %p113 = por %p111, %p112
    %p114 = scmp.ne.s32.totalorder %s103, %s106
    %p115 = scmp.eq.s32.totalorder %s14, 1
    %p116 = por %p114, %p115
    %p117 = scmp.ne.s32.totalorder %s106, %s107
    %p118 = scmp.eq.s32.totalorder %s14, 0
    %p119 = por %p117, %p118
    %p120 = scmp.ne.s32.totalorder %s106, %s107
    %p121 = scmp.eq.s32.totalorder %s15, 1
    %p122 = por %p120, %p121
    %p124 = scmp.ne.s32.totalorder %s107, %s123
    %p125 = scmp.eq.s32.totalorder %s15, 0
    %p126 = por %p124, %p125
    %p127 = scmp.le.s32.totalorder 1, %s9
    %p128 = scmp.lt.s32.totalorder %s9, 3
    %p129 = pnand %p127, %p128
    %p130 = pneg %p129
    // Predicated region
    $region9: #{upsample_block.1} parent=5 // pred_check
      _
    $region10: #{upsample_block.1} parent=5 // pred_check_branch
      %132 = sbr.rel (%p129) target = $region12
    $region11: #{upsample_block.1} parent=5 // pred_region
      %s133 = ssub.s32 %s9, 1
      // Predicated region
      $region13: #{upsample_block.1} parent=11 // pred_check
        %p134 = pneg %p70
      $region14: #{upsample_block.1} parent=11 // pred_check_branch
        %136 = sbr.rel (%p134) target = $region16
      $region15: #{upsample_block.1} parent=11 // pred_region
        _
      $region16: #{upsample_block.1} parent=11 // pred_fallthru
        _
      // Predicated region
      $region17: #{upsample_block.1} parent=11 // pred_check
        %p137 = pneg %p91
      $region18: #{upsample_block.1} parent=11 // pred_check_branch
        %139 = sbr.rel (%p137) target = $region20
      $region19: #{upsample_block.1} parent=11 // pred_region
        _
      $region20: #{upsample_block.1} parent=11 // pred_fallthru
        _
    $region12: #{upsample_block.1} parent=5 // pred_fallthru
      _
    %p140 = scmp.lt.s32.totalorder %s9, 2
    // Predicated region
    $region21: #{upsample_block.1} parent=5 // pred_check
      %p141 = pneg %p140
    $region22: #{upsample_block.1} parent=5 // pred_check_branch
      %143 = sbr.rel (%p141) target = $region24
    $region23: #{upsample_block.1} parent=5 // pred_region
      // Predicated region
      $region25: #{upsample_block.1} parent=23 // pred_check
        %p144 = pneg %p43
      $region26: #{upsample_block.1} parent=23 // pred_check_branch
        %146 = sbr.rel (%p144) target = $region28
      $region27: #{upsample_block.1} parent=23 // pred_region
        %p147 = scmp.lt.s32.totalorder %s16, 1
        %s148 = scalar_select %p147, %s16, 1
        %p149 = scmp.lt.s32.totalorder %s17, 0
        %s150 = scalar_select %p149, %s17, 0
        %s151 = smul.addr %s150, 6
        %s152 = smul.addr %s148, 6
        %s153 = sadd.s32 %s151, %s152
        %s154 = smul.addr %s153, 4
        %s155 = scalar_lea.vmem %s0, %s154
      $region28: #{upsample_block.1} parent=23 // pred_fallthru
        _
    $region24: #{upsample_block.1} parent=5 // pred_fallthru
      _
    %p156 = scmp.le.s32.totalorder 1, %s9
    %p157 = scmp.lt.s32.totalorder %s9, 3
    %p158 = pnand %p156, %p157
    %p159 = pneg %p158
    // Predicated region
    $region29: #{upsample_block.1} parent=5 // pred_check
      _
    $region30: #{upsample_block.1} parent=5 // pred_check_branch
      %161 = sbr.rel (%p158) target = $region32
    $region31: #{upsample_block.1} parent=5 // pred_region
      %s162 = ssub.s32 %s9, 1
      %p163 = scmp.lt.s32.totalorder %s18, 1
      %s164 = scalar_select %p163, %s18, 1
      %p165 = scmp.lt.s32.totalorder %s19, 0
      %s166 = scalar_select %p165, %s19, 0
      %s167 = smul.addr %s166, 6
      %s168 = smul.addr %s164, 6
      %s169 = sadd.s32 %s167, %s168
      %s170 = smul.addr %s169, 4
      %s171 = scalar_lea.vmem %s0, %s170
      %p172 = pneg %p49
      %p173 = pneg %p46
      %p174 = pneg %p70
      %p175 = pneg %p67
      %p176 = pneg %p91
      %p177 = pneg %p88
      %p178 = pneg %p119
      %p179 = pneg %p116
      %p180 = scmp.lt.s32.totalorder %s18, 1
      %s181 = scalar_select %p180, %s18, 1
      %p182 = scmp.lt.s32.totalorder %s19, 0
      %s183 = scalar_select %p182, %s19, 0
      %s184 = smul.addr %s183, 6
      %s185 = smul.addr %s181, 6
      %s186 = sadd.s32 %s184, %s185
      %s187 = smul.addr %s186, 4
      %s188 = scalar_lea.vmem %s3, %s187
      %p189 = scmp.lt.s32.totalorder %s18, 1
      %s190 = scalar_select %p189, %s18, 1
      %p191 = scmp.lt.s32.totalorder %s19, 0
      %s192 = scalar_select %p191, %s19, 0
      %s193 = smul.addr %s192, 6
      %s194 = smul.addr %s190, 6
      %s195 = sadd.s32 %s193, %s194
      %s196 = smul.addr %s195, 4
      %s197 = scalar_lea.vmem %s0, %s196
      %p198 = scmp.lt.s32.totalorder %s18, 1
      %s199 = scalar_select %p198, %s18, 1
      %p200 = scmp.lt.s32.totalorder %s19, 0
      %s201 = scalar_select %p200, %s19, 0
      %s202 = smul.addr %s201, 6
      %s203 = smul.addr %s199, 6
      %s204 = sadd.s32 %s202, %s203
      %s205 = smul.addr %s204, 4
      %s206 = scalar_lea.vmem %s3, %s205
      %v208 = vld [vmem:[%s197] sm:$0xff]
      %v209 = vld [vmem:[%s197 + $0x8] sm:$0xf]
      %v210 = vld [vmem:[%s197 + $0xc] sm:$0xff]
      %v211 = vld [vmem:[%s197 + $0x14] sm:$0xf]
      %212 = vst [vmem:[#allocation2] sm:$0xff] %v208
      %vm213 = vcmask 257024
      %214 = vst.msk [vmem:[#allocation2 + $0x8] sm:$0xf] %vm213, %v209
      %215 = vst [vmem:[#allocation2 + $0xc] sm:$0xff] %v210
      %216 = vst.msk [vmem:[#allocation2 + $0x14] sm:$0xf] %vm213, %v211
      %v217 = vld [vmem:[%s197] sm:$0xff]
      %v218 = vld [vmem:[%s197 + $0x8] sm:$0xf]
      %v219 = vld [vmem:[%s197 + $0xc] sm:$0xff]
      %v220 = vld [vmem:[%s197 + $0x14] sm:$0xf]
      %225 = vrot.lane.b32.xlu0 %v217, 127
      %v226 = vpop.permute.xlu0 %225
      %227 = vrot.lane.b32.xlu0 %v218, 127
      %v228 = vpop.permute.xlu0 %227
      %229 = vrot.lane.b32.xlu0 %v219, 127
      %v230 = vpop.permute.xlu0 %229
      %231 = vrot.lane.b32.xlu0 %v220, 127
      %v232 = vpop.permute.xlu0 %231
      %v233 = vrot.slane %v226, 4
      %v234 = vrot.slane %v228, 4
      %v235 = vrot.slane %v230, 4
      %v236 = vrot.slane %v232, 4
      %vm237 = vcmask 1043456
      %v238 = vsel %vm237, %v233, %v234
      %vm239 = vcmask 1039360
      %v240 = vsel %vm239, %v226, %v238
      %v241 = vsel %vm237, %v235, %v236
      %v242 = vsel %vm239, %v230, %v241
      %247 = vst [vmem:[#allocation2 + $0x18] sm:$0xff] %v240
      %248 = vst.msk [vmem:[#allocation2 + $0x20] sm:$0xf] %vm213, %v228
      %249 = vst [vmem:[#allocation2 + $0x24] sm:$0xff] %v242
      %250 = vst.msk [vmem:[#allocation2 + $0x2c] sm:$0xf] %vm213, %v232
      %v251 = vld [vmem:[%s197] sm:$0xff]
      %v252 = vld [vmem:[%s197 + $0x8] sm:$0xf]
      %v253 = vld [vmem:[%s197 + $0xc] sm:$0xff]
      %v254 = vld [vmem:[%s197 + $0x14] sm:$0xf]
      %259 = vrot.lane.b32.xlu0 %v251, 126
      %v260 = vpop.permute.xlu0 %259
      %261 = vrot.lane.b32.xlu0 %v252, 126
      %v262 = vpop.permute.xlu0 %261
      %263 = vrot.lane.b32.xlu0 %v253, 126
      %v264 = vpop.permute.xlu0 %263
      %265 = vrot.lane.b32.xlu0 %v254, 126
      %v266 = vpop.permute.xlu0 %265
      %v267 = vrot.slane %v260, 4
      %v268 = vrot.slane %v262, 4
      %v269 = vrot.slane %v264, 4
      %v270 = vrot.slane %v266, 4
      %v271 = vsel %vm237, %v267, %v268
      %vm272 = vcmask 1031168
      %v273 = vsel %vm272, %v260, %v271
      %v274 = vsel %vm237, %v269, %v270
      %v275 = vsel %vm272, %v264, %v274
      %280 = vst [vmem:[#allocation2 + $0x30] sm:$0xff] %v273
      %281 = vst.msk [vmem:[#allocation2 + $0x38] sm:$0xf] %vm213, %v262
      %282 = vst [vmem:[#allocation2 + $0x3c] sm:$0xff] %v275
      %283 = vst.msk [vmem:[#allocation2 + $0x44] sm:$0xf] %vm213, %v266
      %v284 = vld [vmem:[%s197] sm:$0xff]
      %v285 = vld [vmem:[%s197 + $0x8] sm:$0xf]
      %v286 = vld [vmem:[%s197 + $0xc] sm:$0xff]
      %v287 = vld [vmem:[%s197 + $0x14] sm:$0xf]
      %292 = vrot.lane.b32.xlu0 %v284, 110
      %v293 = vpop.permute.xlu0 %292
      %294 = vrot.lane.b32.xlu0 %v285, 110
      %v295 = vpop.permute.xlu0 %294
      %296 = vrot.lane.b32.xlu0 %v286, 110
      %v297 = vpop.permute.xlu0 %296
      %298 = vrot.lane.b32.xlu0 %v287, 110
      %v299 = vpop.permute.xlu0 %298
      %v300 = vrot.slane %v293, 4
      %v301 = vrot.slane %v295, 4
      %v302 = vrot.slane %v297, 4
      %v303 = vrot.slane %v299, 4
      %v304 = vsel %vm237, %v300, %v301
      %vm305 = vcmask 900096
      %v306 = vsel %vm305, %v293, %v304
      %v307 = vsel %vm237, %v302, %v303
      %v308 = vsel %vm305, %v297, %v307
      %313 = vst [vmem:[#allocation2 + $0x48] sm:$0xff] %v306
      %314 = vst.msk [vmem:[#allocation2 + $0x50] sm:$0xf] %vm213, %v295
      %315 = vst [vmem:[#allocation2 + $0x54] sm:$0xff] %v308
      %316 = vst.msk [vmem:[#allocation2 + $0x5c] sm:$0xf] %vm213, %v299
      %v317 = vld [vmem:[%s197] sm:$0xff]
      %v318 = vld [vmem:[%s197 + $0x8] sm:$0xf]
      %v319 = vld [vmem:[%s197 + $0xc] sm:$0xff]
      %v320 = vld [vmem:[%s197 + $0x14] sm:$0xf]
      %325 = vrot.lane.b32.xlu0 %v317, 109
      %v326 = vpop.permute.xlu0 %325
      %327 = vrot.lane.b32.xlu0 %v318, 109
      %v328 = vpop.permute.xlu0 %327
      %329 = vrot.lane.b32.xlu0 %v319, 109
      %v330 = vpop.permute.xlu0 %329
      %331 = vrot.lane.b32.xlu0 %v320, 109
      %v332 = vpop.permute.xlu0 %331
      %v333 = vrot.slane %v326, 4
      %v334 = vrot.slane %v328, 4
      %v335 = vrot.slane %v330, 4
      %v336 = vrot.slane %v332, 4
      %v337 = vsel %vm237, %v333, %v334
      %vm338 = vcmask 891904
      %v339 = vsel %vm338, %v326, %v337
      %v340 = vsel %vm237, %v335, %v336
      %v341 = vsel %vm338, %v330, %v340
      %346 = vst [vmem:[#allocation2 + $0x60] sm:$0xff] %v339
      %347 = vst.msk [vmem:[#allocation2 + $0x68] sm:$0xf] %vm213, %v328
      %348 = vst [vmem:[#allocation2 + $0x6c] sm:$0xff] %v341
      %349 = vst.msk [vmem:[#allocation2 + $0x74] sm:$0xf] %vm213, %v332
      %v350 = vld [vmem:[%s197] sm:$0xff]
      %v351 = vld [vmem:[%s197 + $0x8] sm:$0xf]
      %v352 = vld [vmem:[%s197 + $0xc] sm:$0xff]
      %v353 = vld [vmem:[%s197 + $0x14] sm:$0xf]
      %358 = vrot.lane.b32.xlu0 %v350, 108
      %v359 = vpop.permute.xlu0 %358
      %360 = vrot.lane.b32.xlu0 %v351, 108
      %v361 = vpop.permute.xlu0 %360
      %362 = vrot.lane.b32.xlu0 %v352, 108
      %v363 = vpop.permute.xlu0 %362
      %364 = vrot.lane.b32.xlu0 %v353, 108
      %v365 = vpop.permute.xlu0 %364
      %v366 = vrot.slane %v359, 4
      %v367 = vrot.slane %v361, 4
      %v368 = vrot.slane %v363, 4
      %v369 = vrot.slane %v365, 4
      %v370 = vsel %vm237, %v366, %v367
      %vm371 = vcmask 883712
      %v372 = vsel %vm371, %v359, %v370
      %v373 = vsel %vm237, %v368, %v369
      %v374 = vsel %vm371, %v363, %v373
      %379 = vst [vmem:[#allocation2 + $0x78] sm:$0xff] %v372
      %380 = vst.msk [vmem:[#allocation2 + $0x80] sm:$0xf] %vm213, %v361
      %381 = vst [vmem:[#allocation2 + $0x84] sm:$0xff] %v374
      %382 = vst.msk [vmem:[#allocation2 + $0x8c] sm:$0xf] %vm213, %v365
      %v383 = vld [vmem:[%s197] sm:$0xff]
      %v384 = vld [vmem:[%s197 + $0x8] sm:$0xf]
      %v385 = vld [vmem:[%s197 + $0xc] sm:$0xff]
      %v386 = vld [vmem:[%s197 + $0x14] sm:$0xf]
      %391 = vrot.lane.b32.xlu0 %v383, 92
      %v392 = vpop.permute.xlu0 %391
      %393 = vrot.lane.b32.xlu0 %v384, 92
      %v394 = vpop.permute.xlu0 %393
      %395 = vrot.lane.b32.xlu0 %v385, 92
      %v396 = vpop.permute.xlu0 %395
      %397 = vrot.lane.b32.xlu0 %v386, 92
      %v398 = vpop.permute.xlu0 %397
      %v399 = vrot.slane %v392, 4
      %v400 = vrot.slane %v394, 4
      %v401 = vrot.slane %v396, 4
      %v402 = vrot.slane %v398, 4
      %v403 = vsel %vm237, %v399, %v400
      %vm404 = vcmask 752640
      %v405 = vsel %vm404, %v392, %v403
      %v406 = vsel %vm237, %v401, %v402
      %v407 = vsel %vm404, %v396, %v406
      %412 = vst [vmem:[#allocation2 + $0x90] sm:$0xff] %v405
      %413 = vst.msk [vmem:[#allocation2 + $0x98] sm:$0xf] %vm213, %v394
      %414 = vst [vmem:[#allocation2 + $0x9c] sm:$0xff] %v407
      %415 = vst.msk [vmem:[#allocation2 + $0xa4] sm:$0xf] %vm213, %v398
      %v416 = vld [vmem:[%s197] sm:$0xff]
      %v417 = vld [vmem:[%s197 + $0x8] sm:$0xf]
      %v418 = vld [vmem:[%s197 + $0xc] sm:$0xff]
      %v419 = vld [vmem:[%s197 + $0x14] sm:$0xf]
      %424 = vrot.lane.b32.xlu0 %v416, 91
      %v425 = vpop.permute.xlu0 %424
      %426 = vrot.lane.b32.xlu0 %v417, 91
      %v427 = vpop.permute.xlu0 %426
      %428 = vrot.lane.b32.xlu0 %v418, 91
      %v429 = vpop.permute.xlu0 %428
      %430 = vrot.lane.b32.xlu0 %v419, 91
      %v431 = vpop.permute.xlu0 %430
      %v432 = vrot.slane %v425, 4
      %v433 = vrot.slane %v427, 4
      %v434 = vrot.slane %v429, 4
      %v435 = vrot.slane %v431, 4
      %v436 = vsel %vm237, %v432, %v433
      %vm437 = vcmask 744448
      %v438 = vsel %vm437, %v425, %v436
      %v439 = vsel %vm237, %v434, %v435
      %v440 = vsel %vm437, %v429, %v439
      %445 = vst [vmem:[#allocation2 + $0xa8] sm:$0xff] %v438
      %446 = vst.msk [vmem:[#allocation2 + $0xb0] sm:$0xf] %vm213, %v427
      %447 = vst [vmem:[#allocation2 + $0xb4] sm:$0xff] %v440
      %448 = vst.msk [vmem:[#allocation2 + $0xbc] sm:$0xf] %vm213, %v431
      %v449 = vld [vmem:[%s197] sm:$0xff]
      %v450 = vld [vmem:[%s197 + $0x8] sm:$0xf]
      %v451 = vld [vmem:[%s197 + $0xc] sm:$0xff]
      %v452 = vld [vmem:[%s197 + $0x14] sm:$0xf]
      %457 = vrot.lane.b32.xlu0 %v449, 90
      %v458 = vpop.permute.xlu0 %457
      %459 = vrot.lane.b32.xlu0 %v450, 90
      %v460 = vpop.permute.xlu0 %459
      %461 = vrot.lane.b32.xlu0 %v451, 90
      %v462 = vpop.permute.xlu0 %461
      %463 = vrot.lane.b32.xlu0 %v452, 90
      %v464 = vpop.permute.xlu0 %463
      %v465 = vrot.slane %v458, 4
      %v466 = vrot.slane %v460, 4
      %v467 = vrot.slane %v462, 4
      %v468 = vrot.slane %v464, 4
      %v469 = vsel %vm237, %v465, %v466
      %vm470 = vcmask 736256
      %v471 = vsel %vm470, %v458, %v469
      %v472 = vsel %vm237, %v467, %v468
      %v473 = vsel %vm470, %v462, %v472
      %478 = vst [vmem:[#allocation2 + $0xc0] sm:$0xff] %v471
      %479 = vst.msk [vmem:[#allocation2 + $0xc8] sm:$0xf] %vm213, %v460
      %480 = vst [vmem:[#allocation2 + $0xcc] sm:$0xff] %v473
      %481 = vst.msk [vmem:[#allocation2 + $0xd4] sm:$0xf] %vm213, %v464
      %v482 = vld [vmem:[%s1] sm:$0xff]
      %v483 = vld [vmem:[%s1 + $0x8] sm:$0xff]
      %v484 = vld [vmem:[#allocation2] sm:$0xff]
      %v485 = vld [vmem:[#allocation2 + $0x8] sm:$0xf]
      %v486 = vld [vmem:[#allocation2 + $0xc] sm:$0xff]
      %v487 = vld [vmem:[#allocation2 + $0x14] sm:$0xf]
      %v488 = vld [vmem:[#allocation2 + $0x18] sm:$0xff]
      %v489 = vld [vmem:[#allocation2 + $0x20] sm:$0xf]
      %v490 = vld [vmem:[#allocation2 + $0x24] sm:$0xff]
      %v491 = vld [vmem:[#allocation2 + $0x2c] sm:$0xf]
      %v492 = vld [vmem:[#allocation2 + $0x30] sm:$0xff]
      %v493 = vld [vmem:[#allocation2 + $0x38] sm:$0xf]
      %v494 = vld [vmem:[#allocation2 + $0x3c] sm:$0xff]
      %v495 = vld [vmem:[#allocation2 + $0x44] sm:$0xf]
      %v496 = vld [vmem:[#allocation2 + $0x48] sm:$0xff]
      %v497 = vld [vmem:[#allocation2 + $0x50] sm:$0xf]
      %v498 = vld [vmem:[#allocation2 + $0x54] sm:$0xff]
      %v499 = vld [vmem:[#allocation2 + $0x5c] sm:$0xf]
      %v500 = vld [vmem:[#allocation2 + $0x60] sm:$0xff]
      %v501 = vld [vmem:[#allocation2 + $0x68] sm:$0xf]
      %v502 = vld [vmem:[#allocation2 + $0x6c] sm:$0xff]
      %v503 = vld [vmem:[#allocation2 + $0x74] sm:$0xf]
      %v504 = vld [vmem:[#allocation2 + $0x78] sm:$0xff]
      %v505 = vld [vmem:[#allocation2 + $0x80] sm:$0xf]
      %v506 = vld [vmem:[#allocation2 + $0x84] sm:$0xff]
      %v507 = vld [vmem:[#allocation2 + $0x8c] sm:$0xf]
      %v508 = vld [vmem:[#allocation2 + $0x90] sm:$0xff]
      %v509 = vld [vmem:[#allocation2 + $0x98] sm:$0xf]
      %v510 = vld [vmem:[#allocation2 + $0x9c] sm:$0xff]
      %v511 = vld [vmem:[#allocation2 + $0xa4] sm:$0xf]
      %v512 = vld [vmem:[#allocation2 + $0xa8] sm:$0xff]
      %v513 = vld [vmem:[#allocation2 + $0xb0] sm:$0xf]
      %v514 = vld [vmem:[#allocation2 + $0xb4] sm:$0xff]
      %v515 = vld [vmem:[#allocation2 + $0xbc] sm:$0xf]
      %v516 = vld [vmem:[#allocation2 + $0xc0] sm:$0xff]
      %v517 = vld [vmem:[#allocation2 + $0xc8] sm:$0xf]
      %v518 = vld [vmem:[#allocation2 + $0xcc] sm:$0xff]
      %v519 = vld [vmem:[#allocation2 + $0xd4] sm:$0xf]
      %v520 = vld [vmem:[%s2] sm:$0xff]
      %v521 = vld [vmem:[%s2 + $0x8] sm:$0xff]
      %523 = vset.pattern.permute.xlu0 0
      %524 = vperm.xlu0 %523, %v520
      %v525 = vpop.permute.xlu0 %524
      %528 = vset.pattern.permute.xlu0 0
      %529 = vperm.xlu0 %528, %v521
      %v530 = vpop.permute.xlu0 %529
      %v534 = vunpack.c.l.b16 %v482
      %v535 = vunpack.c.h.b16 %v482
      %v536 = vunpack.c.l.b16 %v483
      %v537 = vunpack.c.h.b16 %v483
      %v538 = vpack.c.b16 %v536, %v534
      %v539 = vpack.c.b16 %v537, %v535
      %v577 = vunpack.c.l.b16 %v484
      %v578 = vunpack.c.h.b16 %v484
      %v579 = vunpack.c.l.b16 %v485
      %v580 = vunpack.c.l.b16 %v486
      %v581 = vunpack.c.h.b16 %v486
      %v582 = vunpack.c.l.b16 %v487
      %v583 = vunpack.c.l.b16 %v488
      %v584 = vunpack.c.h.b16 %v488
      %v585 = vunpack.c.l.b16 %v489
      %v586 = vunpack.c.l.b16 %v490
      %v587 = vunpack.c.h.b16 %v490
      %v588 = vunpack.c.l.b16 %v491
      %v589 = vunpack.c.l.b16 %v492
      %v590 = vunpack.c.h.b16 %v492
      %v591 = vunpack.c.l.b16 %v493
      %v592 = vunpack.c.l.b16 %v494
      %v593 = vunpack.c.h.b16 %v494
      %v594 = vunpack.c.l.b16 %v495
      %v595 = vunpack.c.l.b16 %v496
      %v596 = vunpack.c.h.b16 %v496
      %v597 = vunpack.c.l.b16 %v497
      %v598 = vunpack.c.l.b16 %v498
      %v599 = vunpack.c.h.b16 %v498
      %v600 = vunpack.c.l.b16 %v499
      %v601 = vunpack.c.l.b16 %v500
      %v602 = vunpack.c.h.b16 %v500
      %v603 = vunpack.c.l.b16 %v501
      %v604 = vunpack.c.l.b16 %v502
      %v605 = vunpack.c.h.b16 %v502
      %v606 = vunpack.c.l.b16 %v503
      %v607 = vunpack.c.l.b16 %v504
      %v608 = vunpack.c.h.b16 %v504
      %v609 = vunpack.c.l.b16 %v505
      %v610 = vunpack.c.l.b16 %v506
      %v611 = vunpack.c.h.b16 %v506
      %v612 = vunpack.c.l.b16 %v507
      %v613 = vunpack.c.l.b16 %v508
      %v614 = vunpack.c.h.b16 %v508
      %v615 = vunpack.c.l.b16 %v509
      %v616 = vunpack.c.l.b16 %v510
      %v617 = vunpack.c.h.b16 %v510
      %v618 = vunpack.c.l.b16 %v511
      %v619 = vunpack.c.l.b16 %v512
      %v620 = vunpack.c.h.b16 %v512
      %v621 = vunpack.c.l.b16 %v513
      %v622 = vunpack.c.l.b16 %v514
      %v623 = vunpack.c.h.b16 %v514
      %v624 = vunpack.c.l.b16 %v515
      %v625 = vunpack.c.l.b16 %v516
      %v626 = vunpack.c.h.b16 %v516
      %v627 = vunpack.c.l.b16 %v517
      %v628 = vunpack.c.l.b16 %v518
      %v629 = vunpack.c.h.b16 %v518
      %v630 = vunpack.c.l.b16 %v519
      %v631 = vpack.c.b16 %v580, %v577
      %v632 = vpack.c.b16 %v581, %v578
      %v633 = vpack.c.b16 %v582, %v579
      %v634 = vpack.c.b16 %v586, %v583
      %v635 = vpack.c.b16 %v587, %v584
      %v636 = vpack.c.b16 %v588, %v585
      %v637 = vpack.c.b16 %v592, %v589
      %v638 = vpack.c.b16 %v593, %v590
      %v639 = vpack.c.b16 %v594, %v591
      %v640 = vpack.c.b16 %v598, %v595
      %v641 = vpack.c.b16 %v599, %v596
      %v642 = vpack.c.b16 %v600, %v597
      %v643 = vpack.c.b16 %v604, %v601
      %v644 = vpack.c.b16 %v605, %v602
      %v645 = vpack.c.b16 %v606, %v603
      %v646 = vpack.c.b16 %v610, %v607
      %v647 = vpack.c.b16 %v611, %v608
      %v648 = vpack.c.b16 %v612, %v609
      %v649 = vpack.c.b16 %v616, %v613
      %v650 = vpack.c.b16 %v617, %v614
      %v651 = vpack.c.b16 %v618, %v615
      %v652 = vpack.c.b16 %v622, %v619
      %v653 = vpack.c.b16 %v623, %v620
      %v654 = vpack.c.b16 %v624, %v621
      %v655 = vpack.c.b16 %v628, %v625
      %v656 = vpack.c.b16 %v629, %v626
      %v657 = vpack.c.b16 %v630, %v627
      %vm685 = vcmask 130048
      %v687 = vsel %vm685, %v539, 0
      %689 = vmatprep.subr.bf16.mxu0 %v653
      %690 = vmatpush1.bf16.msra.mxu0 %v652
      %691 = vmatprep.subr.bf16.mxu0 %v650
      %692 = vmatpush1.bf16.msra.mxu0 %v649
      %693 = vmatprep.subr.bf16.mxu0 %v647
      %694 = vmatpush1.bf16.msra.mxu0 %v646
      %695 = vmatprep.subr.bf16.mxu0 %v644
      %696 = vmatpush1.bf16.msra.mxu0 %v643
      %697 = vmatprep.subr.bf16.mxu0 %v641
      %698 = vmatpush1.bf16.msra.mxu0 %v640
      %699 = vmatprep.subr.bf16.mxu0 %v638
      %700 = vmatpush1.bf16.msra.mxu0 %v637
      %701 = vmatprep.subr.bf16.mxu0 %v635
      %702 = vmatpush1.bf16.msra.mxu0 %v634
      %703 = vmatprep.subr.bf16.mxu0 %v632
      %704 = vmatpush1.bf16.msra.mxu0 %v631
      %705 = vmatprep.subr.bf16.mxu0 0
      %706 = vmatpush2.bf16.msra.mxu0 0
      %707 = vmatprep.subr.bf16.mxu0 0
      %708 = vmatpush2.bf16.msra.mxu0 0
      %709 = vmatprep.subr.bf16.mxu0 0
      %710 = vmatpush2.bf16.msra.mxu0 0
      %711 = vmatprep.subr.bf16.mxu0 0
      %712 = vmatpush2.bf16.msra.mxu0 0
      %713 = vmatprep.subr.bf16.mxu0 0
      %714 = vmatpush2.bf16.msra.mxu0 0
      %715 = vmatprep.subr.bf16.mxu0 0
      %716 = vmatpush2.bf16.msra.mxu0 0
      %717 = vmatprep.subr.bf16.mxu0 0
      %718 = vmatpush2.bf16.msra.mxu0 0
      %719 = vmatprep.subr.bf16.mxu0 %v656
      %720 = vmatpush2.bf16.msra.mxu0 %v655
      %721 = vmatprep.mubr.bf16.mxu0 %v687
      %722 = vmatmul.mubr.bf16.gmra.mxu0 %v538
      %v723 = vpop.f32.mrf.mxu0
      %v724 = vadd.f32 %v525, %v723
      %v725 = vpop.f32.mrf.mxu0
      %v726 = vadd.f32 %v525, %v725
      %v727 = vpop.f32.mrf.mxu0
      %v728 = vadd.f32 %v530, %v727
      %v729 = vpop.f32.mrf.mxu0
      %v730 = vadd.f32 %v530, %v729
      %731 = vdwg.mxu0
      %732 = vmatprep.subr.bf16.mxu0 0
      %733 = vmatpush1.bf16.msra.mxu0 %v654
      %734 = vmatprep.subr.bf16.mxu0 0
      %735 = vmatpush1.bf16.msra.mxu0 %v651
      %736 = vmatprep.subr.bf16.mxu0 0
      %737 = vmatpush1.bf16.msra.mxu0 %v648
      %738 = vmatprep.subr.bf16.mxu0 0
      %739 = vmatpush1.bf16.msra.mxu0 %v645
      %740 = vmatprep.subr.bf16.mxu0 0
      %741 = vmatpush1.bf16.msra.mxu0 %v642
      %742 = vmatprep.subr.bf16.mxu0 0
      %743 = vmatpush1.bf16.msra.mxu0 %v639
      %744 = vmatprep.subr.bf16.mxu0 0
      %745 = vmatpush1.bf16.msra.mxu0 %v636
      %746 = vmatprep.subr.bf16.mxu0 0
      %747 = vmatpush1.bf16.msra.mxu0 %v633
      %748 = vmatprep.subr.bf16.mxu0 0
      %749 = vmatpush2.bf16.msra.mxu0 0
      %750 = vmatprep.subr.bf16.mxu0 0
      %751 = vmatpush2.bf16.msra.mxu0 0
      %752 = vmatprep.subr.bf16.mxu0 0
      %753 = vmatpush2.bf16.msra.mxu0 0
      %754 = vmatprep.subr.bf16.mxu0 0
      %755 = vmatpush2.bf16.msra.mxu0 0
      %756 = vmatprep.subr.bf16.mxu0 0
      %757 = vmatpush2.bf16.msra.mxu0 0
      %758 = vmatprep.subr.bf16.mxu0 0
      %759 = vmatpush2.bf16.msra.mxu0 0
      %760 = vmatprep.subr.bf16.mxu0 0
      %761 = vmatpush2.bf16.msra.mxu0 0
      %762 = vmatprep.subr.bf16.mxu0 0
      %763 = vmatpush2.bf16.msra.mxu0 %v657
      %764 = vmatprep.mubr.bf16.mxu0 %v687
      %765 = vmatmul.mubr.bf16.gmra.mxu0 %v538
      %v766 = vpop.f32.mrf.mxu0
      %v767 = vadd.f32 %v525, %v766
      %v768 = vpop.f32.mrf.mxu0
      %v769 = vpop.f32.mrf.mxu0
      %v770 = vadd.f32 %v530, %v769
      %v771 = vpop.f32.mrf.mxu0
      %772 = vdwg.mxu0
      %v773 = vsub.f32 0.0, %v724
      %v774 = vsub.f32 0.0, %v726
      %v775 = vsub.f32 0.0, %v767
      %v776 = vsub.f32 0.0, %v728
      %v777 = vsub.f32 0.0, %v730
      %v778 = vsub.f32 0.0, %v770
      %v779 = vmul.f32 %v773, 1.442695
      %v780 = vpow.pop %v779
      %v781 = vmul.f32 %v774, 1.442695
      %v782 = vpow.pop %v781
      %v783 = vmul.f32 %v775, 1.442695
      %v784 = vpow.pop %v783
      %v785 = vmul.f32 %v776, 1.442695
      %v786 = vpow.pop %v785
      %v787 = vmul.f32 %v777, 1.442695
      %v788 = vpow.pop %v787
      %v789 = vmul.f32 %v778, 1.442695
      %v790 = vpow.pop %v789
      %v791 = vadd.f32 %v780, 1.0
      %v792 = vadd.f32 %v782, 1.0
      %v793 = vadd.f32 %v784, 1.0
      %v794 = vadd.f32 %v786, 1.0
      %v795 = vadd.f32 %v788, 1.0
      %v796 = vadd.f32 %v790, 1.0
      %v797 = vrcp.pop %v791
      %v798 = vrcp.pop %v792
      %v799 = vrcp.pop %v793
      %v800 = vrcp.pop %v794
      %v801 = vrcp.pop %v795
      %v802 = vrcp.pop %v796
      %v803 = vmul.f32 %v724, %v797
      %v804 = vmul.f32 %v726, %v798
      %v805 = vmul.f32 %v767, %v799
      %v806 = vmul.f32 %v728, %v800
      %v807 = vmul.f32 %v730, %v801
      %v808 = vmul.f32 %v770, %v802
      %v809 = vpack.c.bf16 %v806, %v803
      %v810 = vpack.c.bf16 %v807, %v804
      %v811 = vpack.c.bf16 %v808, %v805
      %v815 = vunpack.c.l.b16 %v809
      %v816 = vunpack.c.l.b16 %v810
      %v817 = vunpack.c.l.b16 %v811
      %v818 = vunpack.c.h.b16 %v809
      %v819 = vunpack.c.h.b16 %v810
      %v820 = vunpack.c.h.b16 %v811
      %v821 = vpack.c.b16 %v816, %v815
      %v822 = vpack.c.b16 %v817, %v817
      %v823 = vpack.c.b16 %v819, %v818
      %v824 = vpack.c.b16 %v820, %v820
      %829 = vst [vmem:[%s206] sm:$0xff] %v821
      %830 = vst.msk [vmem:[%s206 + $0x8] sm:$0xf] %vm213, %v822
      %831 = vst [vmem:[%s206 + $0xc] sm:$0xff] %v823
      %832 = vst.msk [vmem:[%s206 + $0x14] sm:$0xf] %vm213, %v824
      %p833 = scmp.lt.s32.totalorder %s18, 1
      %s834 = scalar_select %p833, %s18, 1
      %p835 = scmp.lt.s32.totalorder %s19, 0
      %s836 = scalar_select %p835, %s19, 0
      %s837 = smul.addr %s836, 6
      %s838 = smul.addr %s834, 6
      %s839 = sadd.s32 %s837, %s838
      %s840 = smul.addr %s839, 4
      %s841 = scalar_lea.vmem %s3, %s840
      // Predicated region
      $region33: #{upsample_block.1} parent=31 // pred_check
        %p842 = pneg %p116
      $region34: #{upsample_block.1} parent=31 // pred_check_branch
        %844 = sbr.rel (%p842) target = $region36
      $region35: #{upsample_block.1} parent=31 // pred_region
        _
      $region36: #{upsample_block.1} parent=31 // pred_fallthru
        _
    $region32: #{upsample_block.1} parent=5 // pred_fallthru
      _
    %p845 = scmp.le.s32.totalorder 2, %s9
    // Predicated region
    $region37: #{upsample_block.1} parent=5 // pred_check
      %p846 = pneg %p845
    $region38: #{upsample_block.1} parent=5 // pred_check_branch
      %848 = sbr.rel (%p846) target = $region40
    $region39: #{upsample_block.1} parent=5 // pred_region
      %s849 = ssub.s32 %s9, 2
      // Predicated region
      $region41: #{upsample_block.1} parent=39 // pred_check
        %p850 = pneg %p122
      $region42: #{upsample_block.1} parent=39 // pred_check_branch
        %852 = sbr.rel (%p850) target = $region44
      $region43: #{upsample_block.1} parent=39 // pred_region
        %p853 = scmp.lt.s32.totalorder %s20, 1
        %s854 = scalar_select %p853, %s20, 1
        %p855 = scmp.lt.s32.totalorder %s21, 0
        %s856 = scalar_select %p855, %s21, 0
        %s857 = smul.addr %s856, 6
        %s858 = smul.addr %s854, 6
        %s859 = sadd.s32 %s857, %s858
        %s860 = smul.addr %s859, 4
        %s861 = scalar_lea.vmem %s3, %s860
      $region44: #{upsample_block.1} parent=39 // pred_fallthru
        _
    $region40: #{upsample_block.1} parent=5 // pred_fallthru
      _
  $region6: #{upsample_block.1} parent=0 // loop_footer
    %s13 = sadd.s32 1, %s9
  $region7: #{upsample_block.1} parent=0 // loop_footer_branch
    %8 = sbr.rel target = $region3
  $region8: #{upsample_block.1} parent=0 // loop_exit
    _

</llo_original>
